<compile_context>
chip_gen: v7x
topology: tpu7x:2x2x1
jax: 0.10.0
libtpu: 0.0.40
codegen_flags: <defaults>
</compile_context>

<pallas_src>
import math

import jax
import jax.numpy as jnp
from jax.experimental import pallas as pl
from jax.experimental.pallas import tpu as pltpu

_LANE_WIDTHS = (1024, 512, 256, 128)  # lane-dense slab widths (multiples of 128)
_TARGET_TILE_BYTES = 4 << 20          # ~4 MiB/tile; 2 arrays x 2 buffers = 16 MiB
_ROW_ALIGN = 32                       # sublane-safe for f32/bf16/int8 packing
_MIN_GRID_STEPS = 4                   # keep several grid steps for v7x (2 TCs/chip)


def _round_up(x: int, m: int) -> int:
    return ((x + m - 1) // m) * m


def _swish_kernel(beta_ref, x_ref, o_ref):
    # beta: learnable scalar parameter, lives in SMEM.
    beta = beta_ref[0, 0]
    # Compute in f32 (v5e VPU/EUP have no bf16 path; also keeps math exact).
    x = x_ref[...].astype(jnp.float32)
    y = x * jax.nn.sigmoid(beta * x)
    # Explicit cast back to the output dtype (avoids f32->bf16 store mismatch).
    o_ref[...] = y.astype(o_ref.dtype)


def swish_pallas(x: jax.Array, beta) -> jax.Array:
    """Swish forward: x * sigmoid(beta * x). `beta` is a scalar parameter."""
    orig_shape = x.shape
    orig_dtype = x.dtype
    total = math.prod(orig_shape) if orig_shape else 1

    # Degenerate empty tensor: nothing to compute.
    if total == 0:
        return x

    # ---- lane width: no-pad fast path when some width divides `total` ----
    width = None
    for w in _LANE_WIDTHS:
        if total % w == 0:
            width = w
            break
    needs_pad = width is None
    if needs_pad:
        # Rare path: element count not a multiple of 128.
        # TODO(synk): handle the <width tail with a trivial JAX expression (or
        # fuse the pad via allow_input_fusion) to avoid this extra HBM pass.
        width = _LANE_WIDTHS[0]

    rows = -(-total // width)  # ceil division
    flat = x.reshape(-1)
    if needs_pad:
        flat = jnp.pad(flat, (0, rows * width - total))
    x2d = flat.reshape(rows, width)

    # ---- row tiling: ~4 MiB per tile, capped so mid/large tensors get >=4
    #      grid steps (feeds both v7x TensorCores via the "parallel" axis) ----
    itemsize = jnp.dtype(orig_dtype).itemsize
    max_rows = max(
        _ROW_ALIGN,
        (_TARGET_TILE_BYTES // (width * itemsize)) // _ROW_ALIGN * _ROW_ALIGN,
    )
    if rows > _ROW_ALIGN * _MIN_GRID_STEPS:
        max_rows = min(max_rows, _round_up(-(-rows // _MIN_GRID_STEPS), _ROW_ALIGN))
    # If the whole slab fits in one tile, use the exact row count (block dim
    # equal to the full array dim is always legal); otherwise an aligned tile
    # with a ragged last block (Pallas pads OOB reads / drops OOB writes).
    tm = rows if rows <= max_rows else max_rows
    grid = (-(-rows // tm),)

    beta2d = jnp.asarray(beta, dtype=jnp.float32).reshape(1, 1)

    out2d = pl.pallas_call(
        _swish_kernel,
        out_shape=jax.ShapeDtypeStruct((rows, width), orig_dtype),
        grid_spec=pltpu.PrefetchScalarGridSpec(
            num_scalar_prefetch=0,
            grid=grid,
            in_specs=[
                # scalar beta, kept whole in SMEM for every grid step
                pl.BlockSpec(memory_space=pltpu.MemorySpace.SMEM),
                # lane-dense row tile of the flattened input
                pl.BlockSpec((tm, width), lambda i: (i, 0)),
            ],
            out_specs=pl.BlockSpec((tm, width), lambda i: (i, 0)),
        ),
        compiler_params=pltpu.CompilerParams(
            dimension_semantics=("parallel",),  # lets v7x shard across both TCs
            vmem_limit_bytes=32 << 20,          # lifts v5e's 16 MiB scoped default
        ),
    )(beta2d, x2d)

    out_flat = out2d.reshape(-1)
    if needs_pad:
        out_flat = out_flat[:total]  # drop padding only on the rare ragged path
    return out_flat.reshape(orig_shape)


if __name__ == "__main__":
    key = jax.random.PRNGKey(0)
    # NCHW input, consistent with typical conv-net usage of this activation.
    x = jax.random.normal(key, (2, 4, 16, 16), dtype=jnp.float32)

    # Deterministic parameter init matching nn.Parameter(torch.tensor(1.0)).
    beta = jnp.float32(1.0)

    y = swish_pallas(x, beta)
    y = jax.block_until_ready(y)

    # Sanity check vs. plain-JAX reference (f32 tolerances; loosen for bf16).
    y_ref = x * jax.nn.sigmoid(beta * x)
    assert y.shape == x.shape and y.dtype == x.dtype
    assert jnp.allclose(y, y_ref, atol=1e-6, rtol=1e-6)

    print("KERNEL_OK")
</pallas_src>

<mosaic_0001>
module attributes {stable_mosaic.version = 11 : i64} {
  func.func @_swish_kernel(%arg0: i32, %arg1: memref<1x1xf32, #tpu.memory_space<smem>>, %arg2: memref<2x1024xf32, #tpu.memory_space<vmem>>, %arg3: memref<2x1024xf32, #tpu.memory_space<vmem>>) attributes {dimension_semantics = [#tpu.dimension_semantics<parallel>], iteration_bounds = array<i64: 1>, scalar_prefetch = 0 : i64, scratch_operands = 0 : i64, tpu.core_type = #tpu.core_type<tc>, window_params = [{transform_indices = @transform_0, window_bounds = array<i64: 1, 1>}, {transform_indices = @transform_1, window_bounds = array<i64: 2, 1024>}, {transform_indices = @transform_2, window_bounds = array<i64: 2, 1024>}]} {
    %c0 = arith.constant 0 : index
    %c0_0 = arith.constant 0 : index
    %0 = memref.load %arg1[%c0, %c0_0] : memref<1x1xf32, #tpu.memory_space<smem>>
    %c0_1 = arith.constant 0 : index
    %c0_2 = arith.constant 0 : index
    %1 = vector.load %arg2[%c0_1, %c0_2] : memref<2x1024xf32, #tpu.memory_space<vmem>>, vector<2x1024xf32>
    %2 = vector.broadcast %0 : f32 to vector<2x1024xf32>
    %3 = arith.mulf %2, %1 : vector<2x1024xf32>
    %4 = arith.negf %3 : vector<2x1024xf32>
    %5 = math.exp %4 : vector<2x1024xf32>
    %cst = arith.constant 1.000000e+00 : f32
    %6 = vector.broadcast %cst : f32 to vector<2x1024xf32>
    %7 = arith.addf %6, %5 : vector<2x1024xf32>
    %8 = arith.divf %6, %7 : vector<2x1024xf32>
    %9 = arith.mulf %1, %8 : vector<2x1024xf32>
    %c0_3 = arith.constant 0 : index
    %c0_4 = arith.constant 0 : index
    %10 = vector.load %arg3[%c0_3, %c0_4] : memref<2x1024xf32, #tpu.memory_space<vmem>>, vector<2x1024xf32>
    tpu.vector_store %arg3[%c0_3, %c0_4], %9 {strides = array<i32>} : memref<2x1024xf32, #tpu.memory_space<vmem>>, vector<2x1024xf32>,
    return
  }
  func.func @transform_0(%arg0: i32) -> (i32, i32) {
    %c0_i32 = arith.constant 0 : i32
    %c0_i32_0 = arith.constant 0 : i32
    %c0_i32_1 = arith.constant 0 : i32
    return %c0_i32, %c0_i32_0 : i32, i32
  }
  func.func @transform_1(%arg0: i32) -> (i32, i32) {
    %c0_i32 = arith.constant 0 : i32
    %c0_i32_0 = arith.constant 0 : i32
    return %arg0, %c0_i32 : i32, i32
  }
  func.func @transform_2(%arg0: i32) -> (i32, i32) {
    %c0_i32 = arith.constant 0 : i32
    %c0_i32_0 = arith.constant 0 : i32
    return %arg0, %c0_i32 : i32, i32
  }
}

</mosaic_0001>

<llo_original>
// kernel: tpu_custom_call.1
$region0: #{tpu_custom_call.1}
  #allocation0 [shape = 'u32[]', space=smem, size = 0x4, offset = 0x4, fixed_abs, tag = 'smem constant byte address 0x4 - core index']
  #allocation1 [shape = 'u32[144,128]{1,0:T(1,128)}', space=vmem, size = 0x12000, scoped, tag = 'internal scratch']
  #allocation2 [shape = 'f32[1,1]{1,0:T(1,128)S(6)}', space=smem, size = 0x200, scoped, tag = 'scoped memory for tpu_custom_call.1']
  %s0 = inlined_call_operand.<no memory space> [shape: f32[1,1], index: 0, kind: input, shape index: {}]
  %s1 = inlined_call_operand.hbm [shape: f32[2,1024], index: 1, kind: input, shape index: {}]
  %s2 = inlined_call_operand.hbm [shape: f32[2,1024], index: 2, kind: output, shape index: {}]
  %s3 = sld [smem:[#allocation0]]
  $region22: #{tpu_custom_call.1} parent=0
    _
  %s5 = ssub.s32 1, %s3
  %s6 = scalar_select 0, %s5, %s3
  %7 = sst [smem:[#allocation2]] %s0
  $region1: #{tpu_custom_call.1} parent=0
    #allocation3 [shape = 'u8[8192]{0}', space=vmem, size = 0x2000, scoped, tag = 'input window, operand 1, single buffered']
    #allocation4 [shape = 's32[1]{0}', space=sflag, size = 0x4, scoped, tag = 'scoped memory for tpu_custom_call.1']
    #allocation5 [shape = 's32[1]{0}', space=sflag, size = 0x4, scoped, tag = 'scoped memory for tpu_custom_call.1']
    #allocation6 [shape = 'u8[8192]{0}', space=vmem, size = 0x2000, scoped, tag = 'output window, operand 0, single buffered']
    %8 = vsyncpa [#allocation4], 0
    %9 = vsyncpa [#allocation5], 0
    // Predicated region
    $region2: #{tpu_custom_call.1} parent=1 // pred_check
      _
    $region3: #{tpu_custom_call.1} parent=1 // pred_check_branch
      %11 = sbr.rel (0) target = $region5
    $region4: #{tpu_custom_call.1} parent=1 // pred_region
      _
    $region5: #{tpu_custom_call.1} parent=1 // pred_fallthru
      _
    // Predicated region
    $region6: #{tpu_custom_call.1} parent=1 // pred_check
      _
    $region7: #{tpu_custom_call.1} parent=1 // pred_check_branch
      %13 = sbr.rel (0) target = $region9
    $region8: #{tpu_custom_call.1} parent=1 // pred_region
      %s15 = ssub.s32 256, 256
      %16 = vsyncadd [#allocation4], %s15
      %s18 = sshll.u32 [#allocation3], 4
      %s19 = int_to_ptr.vmem [resolvable:$true] %s18
      %21 = dma.hbm_to_vmem [thread:$0]  %s1, 256, %s19, [#allocation4]
    $region9: #{tpu_custom_call.1} parent=1 // pred_fallthru
      _
    // Predicated region
    $region10: #{tpu_custom_call.1} parent=1 // pred_check
      _
    $region11: #{tpu_custom_call.1} parent=1 // pred_check_branch
      %23 = sbr.rel (0) target = $region13
    $region12: #{tpu_custom_call.1} parent=1 // pred_region
      %24 = dma.done [#allocation4], 256
    $region13: #{tpu_custom_call.1} parent=1 // pred_fallthru
      _
    %s25 = sld [smem:[#allocation2]]
    %v26 = vld [vmem:[#allocation3] sm:$0xff]
    %v27 = vld [vmem:[#allocation3 + $0x8] sm:$0xff]
    %v28 = vstv %s25
    %v29 = vmul.f32 %v28, %v26
    %v30 = vmul.f32 %v28, %v27
    %v31 = vxor.u32 %v29, 2147483648
    %v32 = vxor.u32 %v30, 2147483648
    %v33 = vmul.f32 %v31, 1.442695
    %v34 = vpow.pop %v33
    %v35 = vmul.f32 %v32, 1.442695
    %v36 = vpow.pop %v35
    %v37 = vadd.f32 %v34, 1.0
    %v38 = vadd.f32 %v36, 1.0
    %v39 = vrcp.pop %v37
    %v40 = vmul.f32 1.0, %v39
    %v41 = vrcp.pop %v38
    %v42 = vmul.f32 1.0, %v41
    %v43 = vmul.f32 %v26, %v40
    %v44 = vmul.f32 %v27, %v42
    %45 = vst [vmem:[#allocation6] sm:$0xff] %v43
    %46 = vst [vmem:[#allocation6 + $0x8] sm:$0xff] %v44
    // Predicated region
    $region14: #{tpu_custom_call.1} parent=1 // pred_check
      _
    $region15: #{tpu_custom_call.1} parent=1 // pred_check_branch
      %48 = sbr.rel (0) target = $region17
    $region16: #{tpu_custom_call.1} parent=1 // pred_region
      %s50 = ssub.s32 256, 256
      %51 = vsyncadd [#allocation5], %s50
      %s53 = sshll.u32 [#allocation6], 4
      %s54 = int_to_ptr.vmem [resolvable:$true] %s53
      %56 = dma.vmem_to_hbm [thread:$0]  %s54, 256, %s2, [#allocation5]
    $region17: #{tpu_custom_call.1} parent=1 // pred_fallthru
      _
    // Predicated region
    $region18: #{tpu_custom_call.1} parent=1 // pred_check
      _
    $region19: #{tpu_custom_call.1} parent=1 // pred_check_branch
      %58 = sbr.rel (0) target = $region21
    $region20: #{tpu_custom_call.1} parent=1 // pred_region
      %59 = dma.done [#allocation5], 256
    $region21: #{tpu_custom_call.1} parent=1 // pred_fallthru
      _
    %60 = vsyncpa [#allocation4], 1
    %61 = vsyncpa [#allocation5], 1

</llo_original>
